<compile_context>
chip_gen: v7x
topology: tpu7x:2x2x1
jax: 0.10.0
libtpu: 0.0.40
codegen_flags: <defaults>
</compile_context>

<pallas_src>
import math

import jax
import jax.numpy as jnp
from jax.experimental import pallas as pl
from jax.experimental.pallas import tpu as pltpu


# ----------------------------------------------------------------------------
# Kernel
# ----------------------------------------------------------------------------
def mlp_onp_kernel(times_ref,          # scalar-prefetch: [1] int32 domain index
                                       # (consumed only by the w3/b3 index_maps)
                   x_ref,              # [TB, D]   f32 raw input tile
                   w0_ref, b0_ref,     # [Dp, Hp] bf16, [1, Hp] f32
                   w3_ref, b3_ref,     # [Hp, Op] bf16 (folded, domain-selected), [1, Op] f32
                   o_ref,              # [TB, Op]  f32 (lane-dense, Op = 128)
                   xp_ref):            # scratch [TB, Dp] bf16 (lane-dense MXU LHS)
    d = x_ref.shape[1]
    dp = xp_ref.shape[1]

    # Build a lane-dense bf16 LHS in VMEM: real features in lanes [:d], zeros in the pad.
    if d < dp:
        xp_ref[:, d:] = jnp.zeros((xp_ref.shape[0], dp - d), xp_ref.dtype)
    xp_ref[:, :d] = x_ref[...].astype(xp_ref.dtype)

    # layer_0: Linear (bf16 MXU operands, f32 accumulate) + bias
    h = jnp.dot(xp_ref[...], w0_ref[...], preferred_element_type=jnp.float32) + b0_ref[...]
    # relu_0: LeakyReLU (default negative_slope = 0.01), f32 elementwise
    h = jnp.where(h >= 0.0, h, jnp.float32(0.01) * h)
    # bn0 folded into layer_3:  out = h @ (scale*W3^T) + (shift @ W3^T + b3)
    out = jnp.dot(h.astype(w3_ref.dtype), w3_ref[...],
                  preferred_element_type=jnp.float32) + b3_ref[...]
    o_ref[...] = out.astype(o_ref.dtype)


# ----------------------------------------------------------------------------
# Wrapper
# ----------------------------------------------------------------------------
def _num_tensorcores():
    """Best-effort TensorCore count per chip (v7x exposes 2; v5e/v6e expose 1)."""
    try:
        kind = jax.devices()[0].device_kind.lower()
    except Exception:
        return 1
    return 2 if "v7" in kind else 1


def _select_batch_tile(batch, num_tc):
    """One grid step per TensorCore (capped), sublane-aligned."""
    tb = pl.cdiv(batch, max(num_tc, 1))
    tb = min(tb, 1024)                 # keep per-step tiles modest for huge batches
    if tb >= batch:
        return batch                   # single full-batch block (always a legal block shape)
    return max(8, ((tb + 7) // 8) * 8)


def mlp_onp_forward(x, times, prepared, *, tb=None):
    """x: [B, D] f32 (raw, untouched), times: [1] int32 domain index,
    prepared: dict from prepare_params()."""
    B, D = x.shape
    d_pad, h_pad = prepared["w0"].shape
    ndom, _, o_pad = prepared["w3"].shape
    out_features = prepared["out_features"]
    assert D <= d_pad

    if tb is None:
        tb = _select_batch_tile(B, _num_tensorcores())
    nb = pl.cdiv(B, tb)

    grid_spec = pltpu.PrefetchScalarGridSpec(
        num_scalar_prefetch=1,
        grid=(nb,),
        in_specs=[
            pl.BlockSpec((tb, D), lambda i, t: (i, 0)),             # raw x tile (marches batch)
            pl.BlockSpec((d_pad, h_pad), lambda i, t: (0, 0)),      # w0 (VMEM-resident)
            pl.BlockSpec((1, h_pad), lambda i, t: (0, 0)),          # b0
            pl.BlockSpec((pl.Squeezed(), h_pad, o_pad),
                         lambda i, t: (t[0], 0, 0)),                # folded w3, domain-selected
            pl.BlockSpec((pl.Squeezed(), 1, o_pad),
                         lambda i, t: (t[0], 0, 0)),                # folded b3, domain-selected
        ],
        out_specs=pl.BlockSpec((tb, o_pad), lambda i, t: (i, 0)),   # lane-dense output
        scratch_shapes=[pltpu.VMEM((tb, d_pad), prepared["w0"].dtype)],
    )

    cost = pl.CostEstimate(
        flops=2 * B * (d_pad * h_pad + h_pad * o_pad),
        transcendentals=0,
        bytes_accessed=(x.size * x.dtype.itemsize
                        + prepared["w0"].size * prepared["w0"].dtype.itemsize
                        + prepared["b0"].size * prepared["b0"].dtype.itemsize
                        + h_pad * o_pad * prepared["w3"].dtype.itemsize
                        + o_pad * 4
                        + B * o_pad * 4),
    )

    out = pl.pallas_call(
        mlp_onp_kernel,
        out_shape=jax.ShapeDtypeStruct((B, o_pad), jnp.float32),
        grid_spec=grid_spec,
        compiler_params=pltpu.CompilerParams(dimension_semantics=("parallel",)),
        cost_estimate=cost,
    )(times, x, prepared["w0"], prepared["b0"], prepared["w3"], prepared["b3"])

    return out[:, :out_features]


# ----------------------------------------------------------------------------
# Parameter construction (PyTorch layout) + one-time TPU prep (fold + pad + cast)
# ----------------------------------------------------------------------------
def init_raw_params(key, data_shape, hidden_shape, out_shape, domains):
    """PyTorch-layout params.  Linear weights kaiming_normal_ (fan_in, gain=sqrt(2)),
    biases zero.  GraphBN per-domain running stats / affine are mildly randomized so
    the domain selection and BN folding are actually exercised (still deterministic)."""
    k0, k3, kg, kb, km, kv = jax.random.split(key, 6)

    def kaiming(k, fan_out, fan_in):
        std = math.sqrt(2.0) / math.sqrt(fan_in)
        return jax.random.normal(k, (fan_out, fan_in), dtype=jnp.float32) * std

    return {
        "w0": kaiming(k0, hidden_shape, data_shape),       # [H, D]
        "b0": jnp.zeros((hidden_shape,), jnp.float32),
        "w3": kaiming(k3, out_shape, hidden_shape),        # [O, H]
        "b3": jnp.zeros((out_shape,), jnp.float32),
        "gamma": 1.0 + 0.1 * jax.random.normal(kg, (domains, hidden_shape), jnp.float32),
        "beta": 0.1 * jax.random.normal(kb, (domains, hidden_shape), jnp.float32),
        "mean": 0.1 * jax.random.normal(km, (domains, hidden_shape), jnp.float32),
        "var": 0.9 + 0.2 * jnp.abs(jax.random.normal(kv, (domains, hidden_shape), jnp.float32)),
    }


def prepare_params(raw, *, d_pad=128, h_pad=256, o_pad=128,
                   compute_dtype=jnp.bfloat16, eps=1e-5):
    """One-time preprocessing: fold eval-mode GraphBN into layer_3, transpose Linear
    weights to [in, out], zero-pad feature dims (D->128, H->256, O->128) to lane/MXU
    aligned sizes, cast matmul operands to bf16 (biases stay f32)."""
    H, D = raw["w0"].shape
    O = raw["w3"].shape[0]
    ndom = raw["gamma"].shape[0]
    assert D <= d_pad and H <= h_pad and O <= o_pad

    # BN fold: y = h*scale + shift  with  scale = g*rsqrt(v+eps), shift = beta - mean*scale
    scale = raw["gamma"] * jax.lax.rsqrt(raw["var"] + eps)      # [domains, H]
    shift = raw["beta"] - raw["mean"] * scale                   # [domains, H]
    w3_t = raw["w3"].T                                          # [H, O]
    w3_fold = scale[:, :, None] * w3_t[None, :, :]              # [domains, H, O]
    b3_fold = shift @ w3_t + raw["b3"][None, :]                 # [domains, O]

    # Pad to lane/MXU-friendly sizes (zero weight rows/cols -> exact semantics).
    w0_p = jnp.zeros((d_pad, h_pad), jnp.float32).at[:D, :H].set(raw["w0"].T)
    b0_p = jnp.zeros((1, h_pad), jnp.float32).at[0, :H].set(raw["b0"])
    w3_p = jnp.zeros((ndom, h_pad, o_pad), jnp.float32).at[:, :H, :O].set(w3_fold)
    b3_p = jnp.zeros((ndom, 1, o_pad), jnp.float32).at[:, 0, :O].set(b3_fold)

    return {
        "w0": w0_p.astype(compute_dtype),   # [Dp, Hp] bf16
        "b0": b0_p,                         # [1, Hp]  f32
        "w3": w3_p.astype(compute_dtype),   # [domains, Hp, Op] bf16
        "b3": b3_p,                         # [domains, 1, Op]  f32
        "out_features": O,
    }


def reference_forward(x, times, raw, *, eps=1e-5):
    """Pure-JAX f32 reference matching the PyTorch forward (eval-mode GraphBN)."""
    d = int(times[0])
    h = x @ raw["w0"].T + raw["b0"]
    h = jnp.where(h >= 0.0, h, 0.01 * h)
    scale = raw["gamma"][d] * jax.lax.rsqrt(raw["var"][d] + eps)
    shift = raw["beta"][d] - raw["mean"][d] * scale
    h = h * scale + shift
    return h @ raw["w3"].T + raw["b3"]


# ----------------------------------------------------------------------------
if __name__ == "__main__":
    key = jax.random.PRNGKey(0)
    DATA, HIDDEN, OUT, DOMAINS = 59, 200, 4, 3   # module defaults: data_shape=59, hidden_shape=200
    B = 256

    kx, kp = jax.random.split(key)
    x = jax.random.normal(kx, (B, DATA), dtype=jnp.float32)
    times = jnp.array([1], dtype=jnp.int32)      # domain index for this batch

    raw = init_raw_params(kp, DATA, HIDDEN, OUT, DOMAINS)
    prepared = prepare_params(raw)

    out = mlp_onp_forward(x, times, prepared)
    out = jax.block_until_ready(out)

    assert out.shape == (B, OUT) and out.dtype == jnp.float32

    # Sanity check against the f32 reference (drift is bf16 operand rounding only).
    ref = reference_forward(x, times, raw)
    max_err = float(jnp.max(jnp.abs(out - ref)))
    assert max_err < 0.5, f"max abs error too large: {max_err}"

    print("KERNEL_OK")
</pallas_src>

<mosaic_0001>
module attributes {stable_mosaic.version = 11 : i64} {
  func.func @mlp_onp_kernel(%arg0: i32, %arg1: memref<1xi32, #tpu.memory_space<smem>>, %arg2: memref<256x59xf32, #tpu.memory_space<vmem>>, %arg3: memref<128x256xbf16, #tpu.memory_space<vmem>>, %arg4: memref<1x256xf32, #tpu.memory_space<vmem>>, %arg5: memref<1x256x128xbf16, #tpu.memory_space<vmem>>, %arg6: memref<1x1x128xf32, #tpu.memory_space<vmem>>, %arg7: memref<256x128xf32, #tpu.memory_space<vmem>>, %arg8: memref<256x128xbf16, #tpu.memory_space<vmem>>) attributes {dimension_semantics = [#tpu.dimension_semantics<parallel>], iteration_bounds = array<i64: 1>, scalar_prefetch = 1 : i64, scratch_operands = 1 : i64, tpu.core_type = #tpu.core_type<tc>, window_params = [{transform_indices = @transform_0, window_bounds = array<i64: 256, 59>}, {pipeline_mode = #tpu.pipeline_mode<synchronous>, transform_indices = @transform_1, window_bounds = array<i64: 128, 256>}, {pipeline_mode = #tpu.pipeline_mode<synchronous>, transform_indices = @transform_2, window_bounds = array<i64: 1, 256>}, {transform_indices = @transform_3, window_bounds = array<i64: 1, 256, 128>}, {transform_indices = @transform_4, window_bounds = array<i64: 1, 1, 128>}, {transform_indices = @transform_5, window_bounds = array<i64: 256, 128>}]} {
    %cst = arith.constant 0.000000e+00 : bf16
    %0 = vector.broadcast %cst : bf16 to vector<256x69xbf16>
    %c0 = arith.constant 0 : index
    %c59 = arith.constant 59 : index
    %1 = vector.load %arg8[%c0, %c59] : memref<256x128xbf16, #tpu.memory_space<vmem>>, vector<256x69xbf16>
    tpu.vector_store %arg8[%c0, %c59], %0 {strides = array<i32>} : memref<256x128xbf16, #tpu.memory_space<vmem>>, vector<256x69xbf16>,
    %c0_0 = arith.constant 0 : index
    %c0_1 = arith.constant 0 : index
    %2 = vector.load %arg2[%c0_0, %c0_1] : memref<256x59xf32, #tpu.memory_space<vmem>>, vector<256x59xf32>
    %3 = arith.truncf %2 : vector<256x59xf32> to vector<256x59xbf16>
    %c0_2 = arith.constant 0 : index
    %c0_3 = arith.constant 0 : index
    %4 = vector.load %arg8[%c0_2, %c0_3] : memref<256x128xbf16, #tpu.memory_space<vmem>>, vector<256x59xbf16>
    tpu.vector_store %arg8[%c0_2, %c0_3], %3 {strides = array<i32>} : memref<256x128xbf16, #tpu.memory_space<vmem>>, vector<256x59xbf16>,
    %c0_4 = arith.constant 0 : index
    %c0_5 = arith.constant 0 : index
    %5 = vector.load %arg8[%c0_4, %c0_5] : memref<256x128xbf16, #tpu.memory_space<vmem>>, vector<256x128xbf16>
    %c0_6 = arith.constant 0 : index
    %c0_7 = arith.constant 0 : index
    %6 = vector.load %arg3[%c0_6, %c0_7] : memref<128x256xbf16, #tpu.memory_space<vmem>>, vector<128x256xbf16>
    %cst_8 = arith.constant dense<0.000000e+00> : vector<256x256xf32>
    %7 = tpu.matmul %5, %6, %cst_8 {dimension_numbers = #tpu.dot_dimension_numbers<[1], [0], [0], [1], [0, 0, 1, 1], [], []>} : vector<256x128xbf16>, vector<128x256xbf16>, vector<256x256xf32> -> vector<256x256xf32>
    %c0_9 = arith.constant 0 : index
    %c0_10 = arith.constant 0 : index
    %8 = vector.load %arg4[%c0_9, %c0_10] : memref<1x256xf32, #tpu.memory_space<vmem>>, vector<1x256xf32>
    %9 = vector.broadcast %8 : vector<1x256xf32> to vector<256x256xf32>
    %10 = arith.addf %7, %9 : vector<256x256xf32>
    %cst_11 = arith.constant 0.000000e+00 : f32
    %11 = vector.broadcast %cst_11 : f32 to vector<256x256xf32>
    %12 = arith.cmpf oge, %10, %11 : vector<256x256xf32>
    %cst_12 = arith.constant 0.00999999977 : f32
    %13 = vector.broadcast %cst_12 : f32 to vector<256x256xf32>
    %14 = arith.mulf %13, %10 : vector<256x256xf32>
    %15 = arith.select %12, %10, %14 : vector<256x256xi1>, vector<256x256xf32>
    %16 = arith.truncf %15 : vector<256x256xf32> to vector<256x256xbf16>
    %c0_13 = arith.constant 0 : index
    %c0_14 = arith.constant 0 : index
    %c0_15 = arith.constant 0 : index
    %17 = vector.load %arg5[%c0_13, %c0_14, %c0_15] : memref<1x256x128xbf16, #tpu.memory_space<vmem>>, vector<1x256x128xbf16>
    %18 = vector.shape_cast %17 : vector<1x256x128xbf16> to vector<256x128xbf16>
    %cst_16 = arith.constant dense<0.000000e+00> : vector<256x128xf32>
    %19 = tpu.matmul %16, %18, %cst_16 {dimension_numbers = #tpu.dot_dimension_numbers<[1], [0], [0], [1], [0, 0, 1, 1], [], []>} : vector<256x256xbf16>, vector<256x128xbf16>, vector<256x128xf32> -> vector<256x128xf32>
    %c0_17 = arith.constant 0 : index
    %c0_18 = arith.constant 0 : index
    %c0_19 = arith.constant 0 : index
    %20 = vector.load %arg6[%c0_17, %c0_18, %c0_19] : memref<1x1x128xf32, #tpu.memory_space<vmem>>, vector<1x1x128xf32>
    %21 = vector.shape_cast %20 : vector<1x1x128xf32> to vector<1x128xf32>
    %22 = vector.broadcast %21 : vector<1x128xf32> to vector<256x128xf32>
    %23 = arith.addf %19, %22 : vector<256x128xf32>
    %c0_20 = arith.constant 0 : index
    %c0_21 = arith.constant 0 : index
    %24 = vector.load %arg7[%c0_20, %c0_21] : memref<256x128xf32, #tpu.memory_space<vmem>>, vector<256x128xf32>
    tpu.vector_store %arg7[%c0_20, %c0_21], %23 {strides = array<i32>} : memref<256x128xf32, #tpu.memory_space<vmem>>, vector<256x128xf32>,
    return
  }
  func.func @transform_0(%arg0: i32, %arg1: memref<1xi32, #tpu.memory_space<smem>>) -> (i32, i32) {
    %c0_i32 = arith.constant 0 : i32
    %c0_i32_0 = arith.constant 0 : i32
    return %arg0, %c0_i32 : i32, i32
  }
  func.func @transform_1(%arg0: i32, %arg1: memref<1xi32, #tpu.memory_space<smem>>) -> (i32, i32) {
    %c0_i32 = arith.constant 0 : i32
    %c0_i32_0 = arith.constant 0 : i32
    %c0_i32_1 = arith.constant 0 : i32
    return %c0_i32, %c0_i32_0 : i32, i32
  }
  func.func @transform_2(%arg0: i32, %arg1: memref<1xi32, #tpu.memory_space<smem>>) -> (i32, i32) {
    %c0_i32 = arith.constant 0 : i32
    %c0_i32_0 = arith.constant 0 : i32
    %c0_i32_1 = arith.constant 0 : i32
    return %c0_i32, %c0_i32_0 : i32, i32
  }
  func.func @transform_3(%arg0: i32, %arg1: memref<1xi32, #tpu.memory_space<smem>>) -> (i32, i32, i32) {
    %c0 = arith.constant 0 : index
    %0 = memref.load %arg1[%c0] : memref<1xi32, #tpu.memory_space<smem>>
    %c0_i32 = arith.constant 0 : i32
    %c0_i32_0 = arith.constant 0 : i32
    %c0_i32_1 = arith.constant 0 : i32
    return %0, %c0_i32, %c0_i32_0 : i32, i32, i32
  }
  func.func @transform_4(%arg0: i32, %arg1: memref<1xi32, #tpu.memory_space<smem>>) -> (i32, i32, i32) {
    %c0 = arith.constant 0 : index
    %0 = memref.load %arg1[%c0] : memref<1xi32, #tpu.memory_space<smem>>
    %c0_i32 = arith.constant 0 : i32
    %c0_i32_0 = arith.constant 0 : i32
    %c0_i32_1 = arith.constant 0 : i32
    return %0, %c0_i32, %c0_i32_0 : i32, i32, i32
  }
  func.func @transform_5(%arg0: i32, %arg1: memref<1xi32, #tpu.memory_space<smem>>) -> (i32, i32) {
    %c0_i32 = arith.constant 0 : i32
    %c0_i32_0 = arith.constant 0 : i32
    return %arg0, %c0_i32 : i32, i32
  }
}

</mosaic_0001>

<llo_original>
// kernel: tpu_custom_call.1
$region0: #{tpu_custom_call.1}
  #allocation0 [shape = 'u32[]', space=smem, size = 0x4, offset = 0x4, fixed_abs, tag = 'smem constant byte address 0x4 - core index']
  #allocation1 [shape = 'u32[144,128]{1,0:T(1,128)}', space=vmem, size = 0x12000, scoped, tag = 'internal scratch']
  #allocation2 [shape = 'bf16[256,128]{1,0:T(16,128)(2,1)}', space=vmem, size = 0x10000, scoped, tag = 'scratch operand']
  #allocation3 [shape = 's32[1]{0}', space=sflag, size = 0x4, scoped, tag = 'scoped memory for tpu_custom_call.1']
  #allocation4 [shape = 's32[1]{0:T(128)S(6)}', space=smem, size = 0x200, scoped, tag = 'prefetched SMEM operand 0']
  %s0 = inlined_call_operand.<no memory space> [shape: s32[1], index: 0, kind: input, shape index: {}]
  %s1 = inlined_call_operand.vmem [shape: f32[256,59], index: 1, kind: input, shape index: {}]
  %s2 = inlined_call_operand.hbm [shape: bf16[128,256], index: 2, kind: input, shape index: {}]
  %s3 = inlined_call_operand.vmem [shape: f32[1,256], index: 3, kind: input, shape index: {}]
  %s4 = inlined_call_operand.vmem [shape: bf16[3,256,128], index: 4, kind: input, shape index: {}]
  %s5 = inlined_call_operand.vmem [shape: f32[3,1,128], index: 5, kind: input, shape index: {}]
  %s6 = inlined_call_operand.hbm [shape: f32[256,128], index: 6, kind: output, shape index: {}]
  %s7 = sld [smem:[#allocation0]]
  $region34: #{tpu_custom_call.1} parent=0
    _
  %s9 = ssub.s32 1, %s7
  %s10 = scalar_select 0, %s9, %s7
  %11 = sst [smem:[#allocation4]] %s0
  $region1: #{tpu_custom_call.1} parent=0
    #allocation5 [shape = 'u8[65536]{0}', space=vmem, size = 0x10000, scoped, tag = 'input window, operand 2, single buffered']
    #allocation6 [shape = 's32[1]{0}', space=sflag, size = 0x4, scoped, tag = 'scoped memory for tpu_custom_call.1']
    #allocation7 [shape = 's32[1]{0}', space=sflag, size = 0x4, scoped, tag = 'scoped memory for tpu_custom_call.1']
    #allocation8 [shape = 'u8[131072]{0}', space=vmem, size = 0x20000, scoped, tag = 'output window, operand 0, single buffered']
    %12 = vsyncpa [#allocation6], 0
    %13 = vsyncpa [#allocation7], 0
    // Predicated region
    $region2: #{tpu_custom_call.1} parent=1 // pred_check
      _
    $region3: #{tpu_custom_call.1} parent=1 // pred_check_branch
      %15 = sbr.rel (0) target = $region5
    $region4: #{tpu_custom_call.1} parent=1 // pred_region
      _
    $region5: #{tpu_custom_call.1} parent=1 // pred_fallthru
      _
    // Predicated region
    $region6: #{tpu_custom_call.1} parent=1 // pred_check
      _
    $region7: #{tpu_custom_call.1} parent=1 // pred_check_branch
      %17 = sbr.rel (0) target = $region9
    $region8: #{tpu_custom_call.1} parent=1 // pred_region
      %s19 = ssub.s32 2048, 2048
      %20 = vsyncadd [#allocation6], %s19
      %s21 = sshll.u32 [#allocation5], 4
      %s22 = int_to_ptr.vmem [resolvable:$true] %s21
      %27 = dma.hbm_to_vmem [thread:$0]  %s2, 2048, %s22, [#allocation6], 128, 128, 8
    $region9: #{tpu_custom_call.1} parent=1 // pred_fallthru
      _
    // Predicated region
    $region10: #{tpu_custom_call.1} parent=1 // pred_check
      _
    $region11: #{tpu_custom_call.1} parent=1 // pred_check_branch
      %29 = sbr.rel (0) target = $region13
    $region12: #{tpu_custom_call.1} parent=1 // pred_region
      _
    $region13: #{tpu_custom_call.1} parent=1 // pred_fallthru
      _
    // Predicated region
    $region14: #{tpu_custom_call.1} parent=1 // pred_check
      _
    $region15: #{tpu_custom_call.1} parent=1 // pred_check_branch
      %31 = sbr.rel (0) target = $region17
    $region16: #{tpu_custom_call.1} parent=1 // pred_region
      %s32 = sld [smem:[#allocation4]]
      %p33 = scmp.lt.s32.totalorder %s32, 2
      %s34 = scalar_select %p33, %s32, 2
      %s35 = smul.addr %s34, 32
      %s36 = smul.addr %s35, 4
      %s37 = scalar_lea.vmem %s4, %s36
      %s38 = sld [smem:[#allocation4]]
    $region17: #{tpu_custom_call.1} parent=1 // pred_fallthru
      _
    // Predicated region
    $region18: #{tpu_custom_call.1} parent=1 // pred_check
      _
    $region19: #{tpu_custom_call.1} parent=1 // pred_check_branch
      %40 = sbr.rel (0) target = $region21
    $region20: #{tpu_custom_call.1} parent=1 // pred_region
      %s41 = sld [smem:[#allocation4]]
      %p42 = scmp.lt.s32.totalorder %s41, 2
      %s43 = scalar_select %p42, %s41, 2
      %s44 = scalar_lea.vmem %s5, %s43
      %s45 = sld [smem:[#allocation4]]
    $region21: #{tpu_custom_call.1} parent=1 // pred_fallthru
      _
    // Predicated region
    $region22: #{tpu_custom_call.1} parent=1 // pred_check
      _
    $region23: #{tpu_custom_call.1} parent=1 // pred_check_branch
      %47 = sbr.rel (0) target = $region25
    $region24: #{tpu_custom_call.1} parent=1 // pred_region
      %48 = dma.done [#allocation6], 2048
    $region25: #{tpu_custom_call.1} parent=1 // pred_fallthru
      _
    %s49 = sld [smem:[#allocation4]]
    %p50 = scmp.lt.s32.totalorder %s49, 2
    %s51 = scalar_select %p50, %s49, 2
    %s52 = smul.addr %s51, 32
    %s53 = smul.addr %s52, 4
    %s54 = scalar_lea.vmem %s4, %s53
    %s55 = sld [smem:[#allocation4]]
    %p56 = scmp.lt.s32.totalorder %s55, 2
    %s57 = scalar_select %p56, %s55, 2
    %s58 = scalar_lea.vmem %s5, %s57
    %s59 = sld [smem:[#allocation4]]
    %p60 = scmp.lt.s32.totalorder %s59, 2
    %s61 = scalar_select %p60, %s59, 2
    %s62 = smul.addr %s61, 32
    %s63 = smul.addr %s62, 4
    %s64 = scalar_lea.vmem %s4, %s63
    %s65 = sld [smem:[#allocation4]]
    %s66 = sld [smem:[#allocation4]]
    %p67 = scmp.lt.s32.totalorder %s66, 2
    %s68 = scalar_select %p67, %s66, 2
    %s69 = scalar_lea.vmem %s5, %s68
    %s70 = sld [smem:[#allocation4]]
    %vm72 = vcmask 1048024
    %73 = vst.msk [vmem:[#allocation2] sm:$0xff] %vm72, 0
    %74 = vst.msk [vmem:[#allocation2 + $0x8] sm:$0xff] %vm72, 0
    %75 = vst.msk [vmem:[#allocation2 + $0x10] sm:$0xff] %vm72, 0
    %76 = vst.msk [vmem:[#allocation2 + $0x18] sm:$0xff] %vm72, 0
    %77 = vst.msk [vmem:[#allocation2 + $0x20] sm:$0xff] %vm72, 0
    %78 = vst.msk [vmem:[#allocation2 + $0x28] sm:$0xff] %vm72, 0
    %79 = vst.msk [vmem:[#allocation2 + $0x30] sm:$0xff] %vm72, 0
    %80 = vst.msk [vmem:[#allocation2 + $0x38] sm:$0xff] %vm72, 0
    %81 = vst.msk [vmem:[#allocation2 + $0x40] sm:$0xff] %vm72, 0
    %82 = vst.msk [vmem:[#allocation2 + $0x48] sm:$0xff] %vm72, 0
    %83 = vst.msk [vmem:[#allocation2 + $0x50] sm:$0xff] %vm72, 0
    %84 = vst.msk [vmem:[#allocation2 + $0x58] sm:$0xff] %vm72, 0
    %85 = vst.msk [vmem:[#allocation2 + $0x60] sm:$0xff] %vm72, 0
    %86 = vst.msk [vmem:[#allocation2 + $0x68] sm:$0xff] %vm72, 0
    %87 = vst.msk [vmem:[#allocation2 + $0x70] sm:$0xff] %vm72, 0
    %88 = vst.msk [vmem:[#allocation2 + $0x78] sm:$0xff] %vm72, 0
    %v89 = vld [vmem:[%s1] sm:$0xff]
    %v90 = vld [vmem:[%s1 + $0x8] sm:$0xff]
    %v91 = vld [vmem:[%s1 + $0x10] sm:$0xff]
    %v92 = vld [vmem:[%s1 + $0x18] sm:$0xff]
    %v93 = vld [vmem:[%s1 + $0x20] sm:$0xff]
    %v94 = vld [vmem:[%s1 + $0x28] sm:$0xff]
    %v95 = vld [vmem:[%s1 + $0x30] sm:$0xff]
    %v96 = vld [vmem:[%s1 + $0x38] sm:$0xff]
    %v97 = vld [vmem:[%s1 + $0x40] sm:$0xff]
    %v98 = vld [vmem:[%s1 + $0x48] sm:$0xff]
    %v99 = vld [vmem:[%s1 + $0x50] sm:$0xff]
    %v100 = vld [vmem:[%s1 + $0x58] sm:$0xff]
    %v101 = vld [vmem:[%s1 + $0x60] sm:$0xff]
    %v102 = vld [vmem:[%s1 + $0x68] sm:$0xff]
    %v103 = vld [vmem:[%s1 + $0x70] sm:$0xff]
    %v104 = vld [vmem:[%s1 + $0x78] sm:$0xff]
    %v105 = vld [vmem:[%s1 + $0x80] sm:$0xff]
    %v106 = vld [vmem:[%s1 + $0x88] sm:$0xff]
    %v107 = vld [vmem:[%s1 + $0x90] sm:$0xff]
    %v108 = vld [vmem:[%s1 + $0x98] sm:$0xff]
    %v109 = vld [vmem:[%s1 + $0xa0] sm:$0xff]
    %v110 = vld [vmem:[%s1 + $0xa8] sm:$0xff]
    %v111 = vld [vmem:[%s1 + $0xb0] sm:$0xff]
    %v112 = vld [vmem:[%s1 + $0xb8] sm:$0xff]
    %v113 = vld [vmem:[%s1 + $0xc0] sm:$0xff]
    %v114 = vld [vmem:[%s1 + $0xc8] sm:$0xff]
    %v115 = vld [vmem:[%s1 + $0xd0] sm:$0xff]
    %v116 = vld [vmem:[%s1 + $0xd8] sm:$0xff]
    %v117 = vld [vmem:[%s1 + $0xe0] sm:$0xff]
    %v118 = vld [vmem:[%s1 + $0xe8] sm:$0xff]
    %v119 = vld [vmem:[%s1 + $0xf0] sm:$0xff]
    %v120 = vld [vmem:[%s1 + $0xf8] sm:$0xff]
    %v121 = vpack.c.bf16 %v90, %v89
    %v122 = vpack.c.bf16 %v92, %v91
    %v123 = vpack.c.bf16 %v94, %v93
    %v124 = vpack.c.bf16 %v96, %v95
    %v125 = vpack.c.bf16 %v98, %v97
    %v126 = vpack.c.bf16 %v100, %v99
    %v127 = vpack.c.bf16 %v102, %v101
    %v128 = vpack.c.bf16 %v104, %v103
    %v129 = vpack.c.bf16 %v106, %v105
    %v130 = vpack.c.bf16 %v108, %v107
    %v131 = vpack.c.bf16 %v110, %v109
    %v132 = vpack.c.bf16 %v112, %v111
    %v133 = vpack.c.bf16 %v114, %v113
    %v134 = vpack.c.bf16 %v116, %v115
    %v135 = vpack.c.bf16 %v118, %v117
    %v136 = vpack.c.bf16 %v120, %v119
    %vm137 = vcmask 482304
    %138 = vst.msk [vmem:[#allocation2] sm:$0xff] %vm137, %v121
    %139 = vst.msk [vmem:[#allocation2 + $0x8] sm:$0xff] %vm137, %v122
    %140 = vst.msk [vmem:[#allocation2 + $0x10] sm:$0xff] %vm137, %v123
    %141 = vst.msk [vmem:[#allocation2 + $0x18] sm:$0xff] %vm137, %v124
    %142 = vst.msk [vmem:[#allocation2 + $0x20] sm:$0xff] %vm137, %v125
    %143 = vst.msk [vmem:[#allocation2 + $0x28] sm:$0xff] %vm137, %v126
    %144 = vst.msk [vmem:[#allocation2 + $0x30] sm:$0xff] %vm137, %v127
    %145 = vst.msk [vmem:[#allocation2 + $0x38] sm:$0xff] %vm137, %v128
    %146 = vst.msk [vmem:[#allocation2 + $0x40] sm:$0xff] %vm137, %v129
    %147 = vst.msk [vmem:[#allocation2 + $0x48] sm:$0xff] %vm137, %v130
    %148 = vst.msk [vmem:[#allocation2 + $0x50] sm:$0xff] %vm137, %v131
    %149 = vst.msk [vmem:[#allocation2 + $0x58] sm:$0xff] %vm137, %v132
    %150 = vst.msk [vmem:[#allocation2 + $0x60] sm:$0xff] %vm137, %v133
    %151 = vst.msk [vmem:[#allocation2 + $0x68] sm:$0xff] %vm137, %v134
    %152 = vst.msk [vmem:[#allocation2 + $0x70] sm:$0xff] %vm137, %v135
    %153 = vst.msk [vmem:[#allocation2 + $0x78] sm:$0xff] %vm137, %v136
    %v154 = vld [vmem:[#allocation2] sm:$0xff]
    %v155 = vld [vmem:[#allocation2 + $0x8] sm:$0xff]
    %v156 = vld [vmem:[#allocation2 + $0x10] sm:$0xff]
    %v157 = vld [vmem:[#allocation2 + $0x18] sm:$0xff]
    %v158 = vld [vmem:[#allocation2 + $0x20] sm:$0xff]
    %v159 = vld [vmem:[#allocation2 + $0x28] sm:$0xff]
    %v160 = vld [vmem:[#allocation2 + $0x30] sm:$0xff]
    %v161 = vld [vmem:[#allocation2 + $0x38] sm:$0xff]
    %v162 = vld [vmem:[#allocation2 + $0x40] sm:$0xff]
    %v163 = vld [vmem:[#allocation2 + $0x48] sm:$0xff]
    %v164 = vld [vmem:[#allocation2 + $0x50] sm:$0xff]
    %v165 = vld [vmem:[#allocation2 + $0x58] sm:$0xff]
    %v166 = vld [vmem:[#allocation2 + $0x60] sm:$0xff]
    %v167 = vld [vmem:[#allocation2 + $0x68] sm:$0xff]
    %v168 = vld [vmem:[#allocation2 + $0x70] sm:$0xff]
    %v169 = vld [vmem:[#allocation2 + $0x78] sm:$0xff]
    %v170 = vld [vmem:[#allocation5] sm:$0xff]
    %v171 = vld [vmem:[#allocation5 + $0x8] sm:$0xff]
    %v172 = vld [vmem:[#allocation5 + $0x10] sm:$0xff]
    %v173 = vld [vmem:[#allocation5 + $0x18] sm:$0xff]
    %v174 = vld [vmem:[#allocation5 + $0x20] sm:$0xff]
    %v175 = vld [vmem:[#allocation5 + $0x28] sm:$0xff]
    %v176 = vld [vmem:[#allocation5 + $0x30] sm:$0xff]
    %v177 = vld [vmem:[#allocation5 + $0x38] sm:$0xff]
    %v178 = vld [vmem:[#allocation5 + $0x40] sm:$0xff]
    %v179 = vld [vmem:[#allocation5 + $0x48] sm:$0xff]
    %v180 = vld [vmem:[#allocation5 + $0x50] sm:$0xff]
    %v181 = vld [vmem:[#allocation5 + $0x58] sm:$0xff]
    %v182 = vld [vmem:[#allocation5 + $0x60] sm:$0xff]
    %v183 = vld [vmem:[#allocation5 + $0x68] sm:$0xff]
    %v184 = vld [vmem:[#allocation5 + $0x70] sm:$0xff]
    %v185 = vld [vmem:[#allocation5 + $0x78] sm:$0xff]
    %v186 = vld [vmem:[%s3] sm:$0x3]
    %v188 = vlaneseq
    %v189 = vshrl.u32 %v188, 7
    %v190 = vsub.s32 0, %v189
    %v191 = vrot.slane %v186, %v190
    %v192 = vlaneseq
    %v193 = vshrl.u32 %v192, 7
    %v194 = vsub.s32 1, %v193
    %v195 = vrot.slane %v186, %v194
    %v214 = vunpack.c.l.b16 %v170
    %v215 = vunpack.c.h.b16 %v170
    %v216 = vunpack.c.l.b16 %v171
    %v217 = vunpack.c.h.b16 %v171
    %v218 = vunpack.c.l.b16 %v172
    %v219 = vunpack.c.h.b16 %v172
    %v220 = vunpack.c.l.b16 %v173
    %v221 = vunpack.c.h.b16 %v173
    %v222 = vunpack.c.l.b16 %v174
    %v223 = vunpack.c.h.b16 %v174
    %v224 = vunpack.c.l.b16 %v175
    %v225 = vunpack.c.h.b16 %v175
    %v226 = vunpack.c.l.b16 %v176
    %v227 = vunpack.c.h.b16 %v176
    %v228 = vunpack.c.l.b16 %v177
    %v229 = vunpack.c.h.b16 %v177
    %v230 = vunpack.c.l.b16 %v178
    %v231 = vunpack.c.h.b16 %v178
    %v232 = vunpack.c.l.b16 %v179
    %v233 = vunpack.c.h.b16 %v179
    %v234 = vunpack.c.l.b16 %v180
    %v235 = vunpack.c.h.b16 %v180
    %v236 = vunpack.c.l.b16 %v181
    %v237 = vunpack.c.h.b16 %v181
    %v238 = vunpack.c.l.b16 %v182
    %v239 = vunpack.c.h.b16 %v182
    %v240 = vunpack.c.l.b16 %v183
    %v241 = vunpack.c.h.b16 %v183
    %v242 = vunpack.c.l.b16 %v184
    %v243 = vunpack.c.h.b16 %v184
    %v244 = vunpack.c.l.b16 %v185
    %v245 = vunpack.c.h.b16 %v185
    %v246 = vpack.c.b16 %v216, %v214
    %v247 = vpack.c.b16 %v217, %v215
    %v248 = vpack.c.b16 %v220, %v218
    %v249 = vpack.c.b16 %v221, %v219
    %v250 = vpack.c.b16 %v224, %v222
    %v251 = vpack.c.b16 %v225, %v223
    %v252 = vpack.c.b16 %v228, %v226
    %v253 = vpack.c.b16 %v229, %v227
    %v254 = vpack.c.b16 %v232, %v230
    %v255 = vpack.c.b16 %v233, %v231
    %v256 = vpack.c.b16 %v236, %v234
    %v257 = vpack.c.b16 %v237, %v235
    %v258 = vpack.c.b16 %v240, %v238
    %v259 = vpack.c.b16 %v241, %v239
    %v260 = vpack.c.b16 %v244, %v242
    %v261 = vpack.c.b16 %v245, %v243
    %278 = vmatprep.subr.bf16.mxu0 %v247
    %279 = vmatpush1.bf16.msra.mxu0 %v246
    %280 = vmatprep.subr.bf16.mxu0 %v249
    %281 = vmatpush1.bf16.msra.mxu0 %v248
    %282 = vmatprep.subr.bf16.mxu0 %v251
    %283 = vmatpush1.bf16.msra.mxu0 %v250
    %284 = vmatprep.subr.bf16.mxu0 %v253
    %285 = vmatpush1.bf16.msra.mxu0 %v252
    %286 = vmatprep.subr.bf16.mxu0 %v255
    %287 = vmatpush1.bf16.msra.mxu0 %v254
    %288 = vmatprep.subr.bf16.mxu0 %v257
    %289 = vmatpush1.bf16.msra.mxu0 %v256
    %290 = vmatprep.subr.bf16.mxu0 %v259
    %291 = vmatpush1.bf16.msra.mxu0 %v258
    %292 = vmatprep.subr.bf16.mxu0 %v261
    %293 = vmatpush1.bf16.msra.mxu0 %v260
    %294 = vmatprep.subr.bf16.mxu0 0
    %295 = vmatpush1.bf16.msra.mxu0 0
    %296 = vmatprep.subr.bf16.mxu0 0
    %297 = vmatpush1.bf16.msra.mxu0 0
    %298 = vmatprep.subr.bf16.mxu0 0
    %299 = vmatpush1.bf16.msra.mxu0 0
    %300 = vmatprep.subr.bf16.mxu0 0
    %301 = vmatpush1.bf16.msra.mxu0 0
    %302 = vmatprep.subr.bf16.mxu0 0
    %303 = vmatpush1.bf16.msra.mxu0 0
    %304 = vmatprep.subr.bf16.mxu0 0
    %305 = vmatpush1.bf16.msra.mxu0 0
    %306 = vmatprep.subr.bf16.mxu0 0
    %307 = vmatpush1.bf16.msra.mxu0 0
    %308 = vmatprep.subr.bf16.mxu0 0
    %309 = vmatpush1.bf16.msra.mxu0 0
    %310 = vmatprep.mubr.bf16.mxu0 0
    %311 = vmatmul.mubr.bf16.gmra.mrb[0].mxu0 %v154
    %v312 = vpop.f32.mrb[0].mxu0
    %v313 = vadd.f32 %v191, %v312
    %v314 = vpop.f32.mrb[0].mxu0
    %v315 = vadd.f32 %v195, %v314
    %v316 = vpop.f32.mrb[0].mxu0
    %v317 = vadd.f32 %v191, %v316
    %v318 = vpop.f32.mrb[0].mxu0
    %v319 = vadd.f32 %v195, %v318
    %320 = vmatprep.mubr.bf16.mxu0 0
    %321 = vmatmul.mubr.bf16.gmra.mrb[0].mxu0 %v155
    %v322 = vpop.f32.mrb[0].mxu0
    %v323 = vadd.f32 %v191, %v322
    %v324 = vpop.f32.mrb[0].mxu0
    %v325 = vadd.f32 %v195, %v324
    %v326 = vpop.f32.mrb[0].mxu0
    %v327 = vadd.f32 %v191, %v326
    %v328 = vpop.f32.mrb[0].mxu0
    %v329 = vadd.f32 %v195, %v328
    %330 = vmatprep.mubr.bf16.mxu0 0
    %331 = vmatmul.mubr.bf16.gmra.mrb[0].mxu0 %v156
    %v332 = vpop.f32.mrb[0].mxu0
    %v333 = vadd.f32 %v191, %v332
    %v334 = vpop.f32.mrb[0].mxu0
    %v335 = vadd.f32 %v195, %v334
    %v336 = vpop.f32.mrb[0].mxu0
    %v337 = vadd.f32 %v191, %v336
    %v338 = vpop.f32.mrb[0].mxu0
    %v339 = vadd.f32 %v195, %v338
    %340 = vmatprep.mubr.bf16.mxu0 0
    %341 = vmatmul.mubr.bf16.gmra.mrb[0].mxu0 %v157
    %v342 = vpop.f32.mrb[0].mxu0
    %v343 = vadd.f32 %v191, %v342
    %v344 = vpop.f32.mrb[0].mxu0
    %v345 = vadd.f32 %v195, %v344
    %v346 = vpop.f32.mrb[0].mxu0
    %v347 = vadd.f32 %v191, %v346
    %v348 = vpop.f32.mrb[0].mxu0
    %v349 = vadd.f32 %v195, %v348
    %350 = vmatprep.mubr.bf16.mxu0 0
    %351 = vmatmul.mubr.bf16.gmra.mrb[0].mxu0 %v158
    %v352 = vpop.f32.mrb[0].mxu0
    %v353 = vadd.f32 %v191, %v352
    %v354 = vpop.f32.mrb[0].mxu0
    %v355 = vadd.f32 %v195, %v354
    %v356 = vpop.f32.mrb[0].mxu0
    %v357 = vadd.f32 %v191, %v356
    %v358 = vpop.f32.mrb[0].mxu0
    %v359 = vadd.f32 %v195, %v358
    %360 = vmatprep.mubr.bf16.mxu0 0
    %361 = vmatmul.mubr.bf16.gmra.mrb[0].mxu0 %v159
    %v362 = vpop.f32.mrb[0].mxu0
    %v363 = vadd.f32 %v191, %v362
    %v364 = vpop.f32.mrb[0].mxu0
    %v365 = vadd.f32 %v195, %v364
    %v366 = vpop.f32.mrb[0].mxu0
    %v367 = vadd.f32 %v191, %v366
    %v368 = vpop.f32.mrb[0].mxu0
    %v369 = vadd.f32 %v195, %v368
    %370 = vmatprep.mubr.bf16.mxu0 0
    %371 = vmatmul.mubr.bf16.gmra.mrb[0].mxu0 %v160
    %v372 = vpop.f32.mrb[0].mxu0
    %v373 = vadd.f32 %v191, %v372
    %v374 = vpop.f32.mrb[0].mxu0
    %v375 = vadd.f32 %v195, %v374
    %v376 = vpop.f32.mrb[0].mxu0
    %v377 = vadd.f32 %v191, %v376
    %v378 = vpop.f32.mrb[0].mxu0
    %v379 = vadd.f32 %v195, %v378
    %380 = vmatprep.mubr.bf16.mxu0 0
    %381 = vmatmul.mubr.bf16.gmra.mrb[0].mxu0 %v161
    %v382 = vpop.f32.mrb[0].mxu0
    %v383 = vadd.f32 %v191, %v382
    %v384 = vpop.f32.mrb[0].mxu0
    %v385 = vadd.f32 %v195, %v384
    %v386 = vpop.f32.mrb[0].mxu0
    %v387 = vadd.f32 %v191, %v386
    %v388 = vpop.f32.mrb[0].mxu0
    %v389 = vadd.f32 %v195, %v388
    %390 = vmatprep.mubr.bf16.mxu0 0
    %391 = vmatmul.mubr.bf16.gmra.mrb[0].mxu0 %v162
    %v392 = vpop.f32.mrb[0].mxu0
    %v393 = vadd.f32 %v191, %v392
    %v394 = vpop.f32.mrb[0].mxu0
    %v395 = vadd.f32 %v195, %v394
    %v396 = vpop.f32.mrb[0].mxu0
    %v397 = vadd.f32 %v191, %v396
    %v398 = vpop.f32.mrb[0].mxu0
    %v399 = vadd.f32 %v195, %v398
    %400 = vmatprep.mubr.bf16.mxu0 0
    %401 = vmatmul.mubr.bf16.gmra.mrb[0].mxu0 %v163
    %v402 = vpop.f32.mrb[0].mxu0
    %v403 = vadd.f32 %v191, %v402
    %v404 = vpop.f32.mrb[0].mxu0
    %v405 = vadd.f32 %v195, %v404
    %v406 = vpop.f32.mrb[0].mxu0
    %v407 = vadd.f32 %v191, %v406
    %v408 = vpop.f32.mrb[0].mxu0
    %v409 = vadd.f32 %v195, %v408
    %410 = vmatprep.mubr.bf16.mxu0 0
    %411 = vmatmul.mubr.bf16.gmra.mrb[0].mxu0 %v164
    %v412 = vpop.f32.mrb[0].mxu0
    %v413 = vadd.f32 %v191, %v412
    %v414 = vpop.f32.mrb[0].mxu0
    %v415 = vadd.f32 %v195, %v414
    %v416 = vpop.f32.mrb[0].mxu0
    %v417 = vadd.f32 %v191, %v416
    %v418 = vpop.f32.mrb[0].mxu0
    %v419 = vadd.f32 %v195, %v418
    %420 = vmatprep.mubr.bf16.mxu0 0
    %421 = vmatmul.mubr.bf16.gmra.mrb[0].mxu0 %v165
    %v422 = vpop.f32.mrb[0].mxu0
    %v423 = vadd.f32 %v191, %v422
    %v424 = vpop.f32.mrb[0].mxu0
    %v425 = vadd.f32 %v195, %v424
    %v426 = vpop.f32.mrb[0].mxu0
    %v427 = vadd.f32 %v191, %v426
    %v428 = vpop.f32.mrb[0].mxu0
    %v429 = vadd.f32 %v195, %v428
    %430 = vmatprep.mubr.bf16.mxu0 0
    %431 = vmatmul.mubr.bf16.gmra.mrb[0].mxu0 %v166
    %v432 = vpop.f32.mrb[0].mxu0
    %v433 = vadd.f32 %v191, %v432
    %v434 = vpop.f32.mrb[0].mxu0
    %v435 = vadd.f32 %v195, %v434
    %v436 = vpop.f32.mrb[0].mxu0
    %v437 = vadd.f32 %v191, %v436
    %v438 = vpop.f32.mrb[0].mxu0
    %v439 = vadd.f32 %v195, %v438
    %440 = vmatprep.mubr.bf16.mxu0 0
    %441 = vmatmul.mubr.bf16.gmra.mrb[0].mxu0 %v167
    %v442 = vpop.f32.mrb[0].mxu0
    %v443 = vadd.f32 %v191, %v442
    %v444 = vpop.f32.mrb[0].mxu0
    %v445 = vadd.f32 %v195, %v444
    %v446 = vpop.f32.mrb[0].mxu0
    %v447 = vadd.f32 %v191, %v446
    %v448 = vpop.f32.mrb[0].mxu0
    %v449 = vadd.f32 %v195, %v448
    %450 = vmatprep.mubr.bf16.mxu0 0
    %451 = vmatmul.mubr.bf16.gmra.mrb[0].mxu0 %v168
    %v452 = vpop.f32.mrb[0].mxu0
    %v453 = vadd.f32 %v191, %v452
    %v454 = vpop.f32.mrb[0].mxu0
    %v455 = vadd.f32 %v195, %v454
    %v456 = vpop.f32.mrb[0].mxu0
    %v457 = vadd.f32 %v191, %v456
    %v458 = vpop.f32.mrb[0].mxu0
    %v459 = vadd.f32 %v195, %v458
    %460 = vmatprep.mubr.bf16.mxu0 0
    %461 = vmatmul.mubr.bf16.gmra.mrb[0].mxu0 %v169
    %v462 = vpop.f32.mrb[0].mxu0
    %v463 = vadd.f32 %v191, %v462
    %v464 = vpop.f32.mrb[0].mxu0
    %v465 = vadd.f32 %v195, %v464
    %v466 = vpop.f32.mrb[0].mxu0
    %v467 = vadd.f32 %v191, %v466
    %v468 = vpop.f32.mrb[0].mxu0
    %v469 = vadd.f32 %v195, %v468
    %470 = vdwg.mxu0
    %vm471 = vcmp.ge.f32.partialorder %v313, 0.0
    %vm472 = vcmp.ge.f32.partialorder %v315, 0.0
    %vm473 = vcmp.ge.f32.partialorder %v317, 0.0
    %vm474 = vcmp.ge.f32.partialorder %v319, 0.0
    %vm475 = vcmp.ge.f32.partialorder %v323, 0.0
    %vm476 = vcmp.ge.f32.partialorder %v325, 0.0
    %vm477 = vcmp.ge.f32.partialorder %v327, 0.0
    %vm478 = vcmp.ge.f32.partialorder %v329, 0.0
    %vm479 = vcmp.ge.f32.partialorder %v333, 0.0
    %vm480 = vcmp.ge.f32.partialorder %v335, 0.0
    %vm481 = vcmp.ge.f32.partialorder %v337, 0.0
    %vm482 = vcmp.ge.f32.partialorder %v339, 0.0
    %vm483 = vcmp.ge.f32.partialorder %v343, 0.0
    %vm484 = vcmp.ge.f32.partialorder %v345, 0.0
    %vm485 = vcmp.ge.f32.partialorder %v347, 0.0
    %vm486 = vcmp.ge.f32.partialorder %v349, 0.0
    %vm487 = vcmp.ge.f32.partialorder %v353, 0.0
    %vm488 = vcmp.ge.f32.partialorder %v355, 0.0
    %vm489 = vcmp.ge.f32.partialorder %v357, 0.0
    %vm490 = vcmp.ge.f32.partialorder %v359, 0.0
    %vm491 = vcmp.ge.f32.partialorder %v363, 0.0
    %vm492 = vcmp.ge.f32.partialorder %v365, 0.0
    %vm493 = vcmp.ge.f32.partialorder %v367, 0.0
    %vm494 = vcmp.ge.f32.partialorder %v369, 0.0
    %vm495 = vcmp.ge.f32.partialorder %v373, 0.0
    %vm496 = vcmp.ge.f32.partialorder %v375, 0.0
    %vm497 = vcmp.ge.f32.partialorder %v377, 0.0
    %vm498 = vcmp.ge.f32.partialorder %v379, 0.0
    %vm499 = vcmp.ge.f32.partialorder %v383, 0.0
    %vm500 = vcmp.ge.f32.partialorder %v385, 0.0
    %vm501 = vcmp.ge.f32.partialorder %v387, 0.0
    %vm502 = vcmp.ge.f32.partialorder %v389, 0.0
    %vm503 = vcmp.ge.f32.partialorder %v393, 0.0
    %vm504 = vcmp.ge.f32.partialorder %v395, 0.0
    %vm505 = vcmp.ge.f32.partialorder %v397, 0.0
    %vm506 = vcmp.ge.f32.partialorder %v399, 0.0
    %vm507 = vcmp.ge.f32.partialorder %v403, 0.0
    %vm508 = vcmp.ge.f32.partialorder %v405, 0.0
    %vm509 = vcmp.ge.f32.partialorder %v407, 0.0
    %vm510 = vcmp.ge.f32.partialorder %v409, 0.0
    %vm511 = vcmp.ge.f32.partialorder %v413, 0.0
    %vm512 = vcmp.ge.f32.partialorder %v415, 0.0
    %vm513 = vcmp.ge.f32.partialorder %v417, 0.0
    %vm514 = vcmp.ge.f32.partialorder %v419, 0.0
    %vm515 = vcmp.ge.f32.partialorder %v423, 0.0
    %vm516 = vcmp.ge.f32.partialorder %v425, 0.0
    %vm517 = vcmp.ge.f32.partialorder %v427, 0.0
    %vm518 = vcmp.ge.f32.partialorder %v429, 0.0
    %vm519 = vcmp.ge.f32.partialorder %v433, 0.0
    %vm520 = vcmp.ge.f32.partialorder %v435, 0.0
    %vm521 = vcmp.ge.f32.partialorder %v437, 0.0
    %vm522 = vcmp.ge.f32.partialorder %v439, 0.0
    %vm523 = vcmp.ge.f32.partialorder %v443, 0.0
    %vm524 = vcmp.ge.f32.partialorder %v445, 0.0
    %vm525 = vcmp.ge.f32.partialorder %v447, 0.0
    %vm526 = vcmp.ge.f32.partialorder %v449, 0.0
    %vm527 = vcmp.ge.f32.partialorder %v453, 0.0
    %vm528 = vcmp.ge.f32.partialorder %v455, 0.0
    %vm529 = vcmp.ge.f32.partialorder %v457, 0.0
    %vm530 = vcmp.ge.f32.partialorder %v459, 0.0
    %vm531 = vcmp.ge.f32.partialorder %v463, 0.0
    %vm532 = vcmp.ge.f32.partialorder %v465, 0.0
    %vm533 = vcmp.ge.f32.partialorder %v467, 0.0
    %vm534 = vcmp.ge.f32.partialorder %v469, 0.0
    %v535 = vmul.f32 %v313, 0.01
    %v536 = vmul.f32 %v315, 0.01
    %v537 = vmul.f32 %v317, 0.01
    %v538 = vmul.f32 %v319, 0.01
    %v539 = vmul.f32 %v323, 0.01
    %v540 = vmul.f32 %v325, 0.01
    %v541 = vmul.f32 %v327, 0.01
    %v542 = vmul.f32 %v329, 0.01
    %v543 = vmul.f32 %v333, 0.01
    %v544 = vmul.f32 %v335, 0.01
    %v545 = vmul.f32 %v337, 0.01
    %v546 = vmul.f32 %v339, 0.01
    %v547 = vmul.f32 %v343, 0.01
    %v548 = vmul.f32 %v345, 0.01
    %v549 = vmul.f32 %v347, 0.01
    %v550 = vmul.f32 %v349, 0.01
    %v551 = vmul.f32 %v353, 0.01
    %v552 = vmul.f32 %v355, 0.01
    %v553 = vmul.f32 %v357, 0.01
    %v554 = vmul.f32 %v359, 0.01
    %v555 = vmul.f32 %v363, 0.01
    %v556 = vmul.f32 %v365, 0.01
    %v557 = vmul.f32 %v367, 0.01
    %v558 = vmul.f32 %v369, 0.01
    %v559 = vmul.f32 %v373, 0.01
    %v560 = vmul.f32 %v375, 0.01
    %v561 = vmul.f32 %v377, 0.01
    %v562 = vmul.f32 %v379, 0.01
    %v563 = vmul.f32 %v383, 0.01
    %v564 = vmul.f32 %v385, 0.01
    %v565 = vmul.f32 %v387, 0.01
    %v566 = vmul.f32 %v389, 0.01
    %v567 = vmul.f32 %v393, 0.01
    %v568 = vmul.f32 %v395, 0.01
    %v569 = vmul.f32 %v397, 0.01
    %v570 = vmul.f32 %v399, 0.01
    %v571 = vmul.f32 %v403, 0.01
    %v572 = vmul.f32 %v405, 0.01
    %v573 = vmul.f32 %v407, 0.01
    %v574 = vmul.f32 %v409, 0.01
    %v575 = vmul.f32 %v413, 0.01
    %v576 = vmul.f32 %v415, 0.01
    %v577 = vmul.f32 %v417, 0.01
    %v578 = vmul.f32 %v419, 0.01
    %v579 = vmul.f32 %v423, 0.01
    %v580 = vmul.f32 %v425, 0.01
    %v581 = vmul.f32 %v427, 0.01
    %v582 = vmul.f32 %v429, 0.01
    %v583 = vmul.f32 %v433, 0.01
    %v584 = vmul.f32 %v435, 0.01
    %v585 = vmul.f32 %v437, 0.01
    %v586 = vmul.f32 %v439, 0.01
    %v587 = vmul.f32 %v443, 0.01
    %v588 = vmul.f32 %v445, 0.01
    %v589 = vmul.f32 %v447, 0.01
    %v590 = vmul.f32 %v449, 0.01
    %v591 = vmul.f32 %v453, 0.01
    %v592 = vmul.f32 %v455, 0.01
    %v593 = vmul.f32 %v457, 0.01
    %v594 = vmul.f32 %v459, 0.01
    %v595 = vmul.f32 %v463, 0.01
    %v596 = vmul.f32 %v465, 0.01
    %v597 = vmul.f32 %v467, 0.01
    %v598 = vmul.f32 %v469, 0.01
    %v599 = vsel %vm471, %v313, %v535
    %v600 = vsel %vm472, %v315, %v536
    %v601 = vsel %vm473, %v317, %v537
    %v602 = vsel %vm474, %v319, %v538
    %v603 = vsel %vm475, %v323, %v539
    %v604 = vsel %vm476, %v325, %v540
    %v605 = vsel %vm477, %v327, %v541
    %v606 = vsel %vm478, %v329, %v542
    %v607 = vsel %vm479, %v333, %v543
    %v608 = vsel %vm480, %v335, %v544
    %v609 = vsel %vm481, %v337, %v545
    %v610 = vsel %vm482, %v339, %v546
    %v611 = vsel %vm483, %v343, %v547
    %v612 = vsel %vm484, %v345, %v548
    %v613 = vsel %vm485, %v347, %v549
    %v614 = vsel %vm486, %v349, %v550
    %v615 = vsel %vm487, %v353, %v551
    %v616 = vsel %vm488, %v355, %v552
    %v617 = vsel %vm489, %v357, %v553
    %v618 = vsel %vm490, %v359, %v554
    %v619 = vsel %vm491, %v363, %v555
    %v620 = vsel %vm492, %v365, %v556
    %v621 = vsel %vm493, %v367, %v557
    %v622 = vsel %vm494, %v369, %v558
    %v623 = vsel %vm495, %v373, %v559
    %v624 = vsel %vm496, %v375, %v560
    %v625 = vsel %vm497, %v377, %v561
    %v626 = vsel %vm498, %v379, %v562
    %v627 = vsel %vm499, %v383, %v563
    %v628 = vsel %vm500, %v385, %v564
    %v629 = vsel %vm501, %v387, %v565
    %v630 = vsel %vm502, %v389, %v566
    %v631 = vsel %vm503, %v393, %v567
    %v632 = vsel %vm504, %v395, %v568
    %v633 = vsel %vm505, %v397, %v569
    %v634 = vsel %vm506, %v399, %v570
    %v635 = vsel %vm507, %v403, %v571
    %v636 = vsel %vm508, %v405, %v572
    %v637 = vsel %vm509, %v407, %v573
    %v638 = vsel %vm510, %v409, %v574
    %v639 = vsel %vm511, %v413, %v575
    %v640 = vsel %vm512, %v415, %v576
    %v641 = vsel %vm513, %v417, %v577
    %v642 = vsel %vm514, %v419, %v578
    %v643 = vsel %vm515, %v423, %v579
    %v644 = vsel %vm516, %v425, %v580
    %v645 = vsel %vm517, %v427, %v581
    %v646 = vsel %vm518, %v429, %v582
    %v647 = vsel %vm519, %v433, %v583
    %v648 = vsel %vm520, %v435, %v584
    %v649 = vsel %vm521, %v437, %v585
    %v650 = vsel %vm522, %v439, %v586
    %v651 = vsel %vm523, %v443, %v587
    %v652 = vsel %vm524, %v445, %v588
    %v653 = vsel %vm525, %v447, %v589
    %v654 = vsel %vm526, %v449, %v590
    %v655 = vsel %vm527, %v453, %v591
    %v656 = vsel %vm528, %v455, %v592
    %v657 = vsel %vm529, %v457, %v593
    %v658 = vsel %vm530, %v459, %v594
    %v659 = vsel %vm531, %v463, %v595
    %v660 = vsel %vm532, %v465, %v596
    %v661 = vsel %vm533, %v467, %v597
    %v662 = vsel %vm534, %v469, %v598
    %v663 = vpack.c.bf16 %v601, %v599
    %v664 = vpack.c.bf16 %v602, %v600
    %v665 = vpack.c.bf16 %v605, %v603
    %v666 = vpack.c.bf16 %v606, %v604
    %v667 = vpack.c.bf16 %v609, %v607
    %v668 = vpack.c.bf16 %v610, %v608
    %v669 = vpack.c.bf16 %v613, %v611
    %v670 = vpack.c.bf16 %v614, %v612
    %v671 = vpack.c.bf16 %v617, %v615
    %v672 = vpack.c.bf16 %v618, %v616
    %v673 = vpack.c.bf16 %v621, %v619
    %v674 = vpack.c.bf16 %v622, %v620
    %v675 = vpack.c.bf16 %v625, %v623
    %v676 = vpack.c.bf16 %v626, %v624
    %v677 = vpack.c.bf16 %v629, %v627
    %v678 = vpack.c.bf16 %v630, %v628
    %v679 = vpack.c.bf16 %v633, %v631
    %v680 = vpack.c.bf16 %v634, %v632
    %v681 = vpack.c.bf16 %v637, %v635
    %v682 = vpack.c.bf16 %v638, %v636
    %v683 = vpack.c.bf16 %v641, %v639
    %v684 = vpack.c.bf16 %v642, %v640
    %v685 = vpack.c.bf16 %v645, %v643
    %v686 = vpack.c.bf16 %v646, %v644
    %v687 = vpack.c.bf16 %v649, %v647
    %v688 = vpack.c.bf16 %v650, %v648
    %v689 = vpack.c.bf16 %v653, %v651
    %v690 = vpack.c.bf16 %v654, %v652
    %v691 = vpack.c.bf16 %v657, %v655
    %v692 = vpack.c.bf16 %v658, %v656
    %v693 = vpack.c.bf16 %v661, %v659
    %v694 = vpack.c.bf16 %v662, %v660
    %v695 = vld [vmem:[%s64] sm:$0xf]
    %v696 = vld [vmem:[%s64 + $0x4] sm:$0xf]
    %v697 = vld [vmem:[%s64 + $0x8] sm:$0xf]
    %v698 = vld [vmem:[%s64 + $0xc] sm:$0xf]
    %v699 = vld [vmem:[%s64 + $0x10] sm:$0xf]
    %v700 = vld [vmem:[%s64 + $0x14] sm:$0xf]
    %v701 = vld [vmem:[%s64 + $0x18] sm:$0xf]
    %v702 = vld [vmem:[%s64 + $0x1c] sm:$0xf]
    %v703 = vld [vmem:[%s64 + $0x20] sm:$0xf]
    %v704 = vld [vmem:[%s64 + $0x24] sm:$0xf]
    %v705 = vld [vmem:[%s64 + $0x28] sm:$0xf]
    %v706 = vld [vmem:[%s64 + $0x2c] sm:$0xf]
    %v707 = vld [vmem:[%s64 + $0x30] sm:$0xf]
    %v708 = vld [vmem:[%s64 + $0x34] sm:$0xf]
    %v709 = vld [vmem:[%s64 + $0x38] sm:$0xf]
    %v710 = vld [vmem:[%s64 + $0x3c] sm:$0xf]
    %v711 = vld [vmem:[%s64 + $0x40] sm:$0xf]
    %v712 = vld [vmem:[%s64 + $0x44] sm:$0xf]
    %v713 = vld [vmem:[%s64 + $0x48] sm:$0xf]
    %v714 = vld [vmem:[%s64 + $0x4c] sm:$0xf]
    %v715 = vld [vmem:[%s64 + $0x50] sm:$0xf]
    %v716 = vld [vmem:[%s64 + $0x54] sm:$0xf]
    %v717 = vld [vmem:[%s64 + $0x58] sm:$0xf]
    %v718 = vld [vmem:[%s64 + $0x5c] sm:$0xf]
    %v719 = vld [vmem:[%s64 + $0x60] sm:$0xf]
    %v720 = vld [vmem:[%s64 + $0x64] sm:$0xf]
    %v721 = vld [vmem:[%s64 + $0x68] sm:$0xf]
    %v722 = vld [vmem:[%s64 + $0x6c] sm:$0xf]
    %v723 = vld [vmem:[%s64 + $0x70] sm:$0xf]
    %v724 = vld [vmem:[%s64 + $0x74] sm:$0xf]
    %v725 = vld [vmem:[%s64 + $0x78] sm:$0xf]
    %v726 = vld [vmem:[%s64 + $0x7c] sm:$0xf]
    %v727 = vld [vmem:[%s69] sm:$0x1]
    %v729 = vlaneseq
    %v730 = vshrl.u32 %v729, 7
    %v731 = vsub.s32 0, %v730
    %v732 = vrot.slane %v727, %v731
    %v766 = vunpack.c.l.b16 %v695
    %v767 = vunpack.c.l.b16 %v696
    %v768 = vunpack.c.l.b16 %v697
    %v769 = vunpack.c.l.b16 %v698
    %v770 = vunpack.c.l.b16 %v699
    %v771 = vunpack.c.l.b16 %v700
    %v772 = vunpack.c.l.b16 %v701
    %v773 = vunpack.c.l.b16 %v702
    %v774 = vunpack.c.l.b16 %v703
    %v775 = vunpack.c.l.b16 %v704
    %v776 = vunpack.c.l.b16 %v705
    %v777 = vunpack.c.l.b16 %v706
    %v778 = vunpack.c.l.b16 %v707
    %v779 = vunpack.c.l.b16 %v708
    %v780 = vunpack.c.l.b16 %v709
    %v781 = vunpack.c.l.b16 %v710
    %v782 = vunpack.c.l.b16 %v711
    %v783 = vunpack.c.l.b16 %v712
    %v784 = vunpack.c.l.b16 %v713
    %v785 = vunpack.c.l.b16 %v714
    %v786 = vunpack.c.l.b16 %v715
    %v787 = vunpack.c.l.b16 %v716
    %v788 = vunpack.c.l.b16 %v717
    %v789 = vunpack.c.l.b16 %v718
    %v790 = vunpack.c.l.b16 %v719
    %v791 = vunpack.c.l.b16 %v720
    %v792 = vunpack.c.l.b16 %v721
    %v793 = vunpack.c.l.b16 %v722
    %v794 = vunpack.c.l.b16 %v723
    %v795 = vunpack.c.l.b16 %v724
    %v796 = vunpack.c.l.b16 %v725
    %v797 = vunpack.c.l.b16 %v726
    %v798 = vpack.c.b16 %v767, %v766
    %v799 = vpack.c.b16 %v769, %v768
    %v800 = vpack.c.b16 %v771, %v770
    %v801 = vpack.c.b16 %v773, %v772
    %v802 = vpack.c.b16 %v775, %v774
    %v803 = vpack.c.b16 %v777, %v776
    %v804 = vpack.c.b16 %v779, %v778
    %v805 = vpack.c.b16 %v781, %v780
    %v806 = vpack.c.b16 %v783, %v782
    %v807 = vpack.c.b16 %v785, %v784
    %v808 = vpack.c.b16 %v787, %v786
    %v809 = vpack.c.b16 %v789, %v788
    %v810 = vpack.c.b16 %v791, %v790
    %v811 = vpack.c.b16 %v793, %v792
    %v812 = vpack.c.b16 %v795, %v794
    %v813 = vpack.c.b16 %v797, %v796
    %830 = vmatprep.subr.bf16.mxu0 0
    %831 = vmatpush1.bf16.msra.mxu0 %v798
    %832 = vmatprep.subr.bf16.mxu0 0
    %833 = vmatpush1.bf16.msra.mxu0 %v799
    %834 = vmatprep.subr.bf16.mxu0 0
    %835 = vmatpush1.bf16.msra.mxu0 %v800
    %836 = vmatprep.subr.bf16.mxu0 0
    %837 = vmatpush1.bf16.msra.mxu0 %v801
    %838 = vmatprep.subr.bf16.mxu0 0
    %839 = vmatpush1.bf16.msra.mxu0 %v802
    %840 = vmatprep.subr.bf16.mxu0 0
    %841 = vmatpush1.bf16.msra.mxu0 %v803
    %842 = vmatprep.subr.bf16.mxu0 0
    %843 = vmatpush1.bf16.msra.mxu0 %v804
    %844 = vmatprep.subr.bf16.mxu0 0
    %845 = vmatpush1.bf16.msra.mxu0 %v805
    %846 = vmatprep.subr.bf16.mxu0 0
    %847 = vmatpush1.bf16.msra.mxu0 %v806
    %848 = vmatprep.subr.bf16.mxu0 0
    %849 = vmatpush1.bf16.msra.mxu0 %v807
    %850 = vmatprep.subr.bf16.mxu0 0
    %851 = vmatpush1.bf16.msra.mxu0 %v808
    %852 = vmatprep.subr.bf16.mxu0 0
    %853 = vmatpush1.bf16.msra.mxu0 %v809
    %854 = vmatprep.subr.bf16.mxu0 0
    %855 = vmatpush1.bf16.msra.mxu0 %v810
    %856 = vmatprep.subr.bf16.mxu0 0
    %857 = vmatpush1.bf16.msra.mxu0 %v811
    %858 = vmatprep.subr.bf16.mxu0 0
    %859 = vmatpush1.bf16.msra.mxu0 %v812
    %860 = vmatprep.subr.bf16.mxu0 0
    %861 = vmatpush1.bf16.msra.mxu0 %v813
    %862 = vmatprep.mubr.bf16.mxu0 %v664
    %863 = vmatmul.mubr.bf16.gmra.mrb[0].mxu0 %v663
    %v864 = vpop.f32.mrb[0].mxu0
    %v865 = vadd.f32 %v732, %v864
    %v866 = vpop.f32.mrb[0].mxu0
    %v867 = vpop.f32.mrb[0].mxu0
    %v868 = vadd.f32 %v732, %v867
    %v869 = vpop.f32.mrb[0].mxu0
    %870 = vmatprep.mubr.bf16.mxu0 %v666
    %871 = vmatmul.mubr.bf16.gmra.mrb[0].mxu0 %v665
    %v872 = vpop.f32.mrb[0].mxu0
    %v873 = vadd.f32 %v732, %v872
    %v874 = vpop.f32.mrb[0].mxu0
    %v875 = vpop.f32.mrb[0].mxu0
    %v876 = vadd.f32 %v732, %v875
    %v877 = vpop.f32.mrb[0].mxu0
    %878 = vmatprep.mubr.bf16.mxu0 %v668
    %879 = vmatmul.mubr.bf16.gmra.mrb[0].mxu0 %v667
    %v880 = vpop.f32.mrb[0].mxu0
    %v881 = vadd.f32 %v732, %v880
    %v882 = vpop.f32.mrb[0].mxu0
    %v883 = vpop.f32.mrb[0].mxu0
    %v884 = vadd.f32 %v732, %v883
    %v885 = vpop.f32.mrb[0].mxu0
    %886 = vmatprep.mubr.bf16.mxu0 %v670
    %887 = vmatmul.mubr.bf16.gmra.mrb[0].mxu0 %v669
    %v888 = vpop.f32.mrb[0].mxu0
    %v889 = vadd.f32 %v732, %v888
    %v890 = vpop.f32.mrb[0].mxu0
    %v891 = vpop.f32.mrb[0].mxu0
    %v892 = vadd.f32 %v732, %v891
    %v893 = vpop.f32.mrb[0].mxu0
    %894 = vmatprep.mubr.bf16.mxu0 %v672
    %895 = vmatmul.mubr.bf16.gmra.mrb[0].mxu0 %v671
    %v896 = vpop.f32.mrb[0].mxu0
    %v897 = vadd.f32 %v732, %v896
    %v898 = vpop.f32.mrb[0].mxu0
    %v899 = vpop.f32.mrb[0].mxu0
    %v900 = vadd.f32 %v732, %v899
    %v901 = vpop.f32.mrb[0].mxu0
    %902 = vmatprep.mubr.bf16.mxu0 %v674
    %903 = vmatmul.mubr.bf16.gmra.mrb[0].mxu0 %v673
    %v904 = vpop.f32.mrb[0].mxu0
    %v905 = vadd.f32 %v732, %v904
    %v906 = vpop.f32.mrb[0].mxu0
    %v907 = vpop.f32.mrb[0].mxu0
    %v908 = vadd.f32 %v732, %v907
    %v909 = vpop.f32.mrb[0].mxu0
    %910 = vmatprep.mubr.bf16.mxu0 %v676
    %911 = vmatmul.mubr.bf16.gmra.mrb[0].mxu0 %v675
    %v912 = vpop.f32.mrb[0].mxu0
    %v913 = vadd.f32 %v732, %v912
    %v914 = vpop.f32.mrb[0].mxu0
    %v915 = vpop.f32.mrb[0].mxu0
    %v916 = vadd.f32 %v732, %v915
    %v917 = vpop.f32.mrb[0].mxu0
    %918 = vmatprep.mubr.bf16.mxu0 %v678
    %919 = vmatmul.mubr.bf16.gmra.mrb[0].mxu0 %v677
    %v920 = vpop.f32.mrb[0].mxu0
    %v921 = vadd.f32 %v732, %v920
    %v922 = vpop.f32.mrb[0].mxu0
    %v923 = vpop.f32.mrb[0].mxu0
    %v924 = vadd.f32 %v732, %v923
    %v925 = vpop.f32.mrb[0].mxu0
    %926 = vmatprep.mubr.bf16.mxu0 %v680
    %927 = vmatmul.mubr.bf16.gmra.mrb[0].mxu0 %v679
    %v928 = vpop.f32.mrb[0].mxu0
    %v929 = vadd.f32 %v732, %v928
    %v930 = vpop.f32.mrb[0].mxu0
    %v931 = vpop.f32.mrb[0].mxu0
    %v932 = vadd.f32 %v732, %v931
    %v933 = vpop.f32.mrb[0].mxu0
    %934 = vmatprep.mubr.bf16.mxu0 %v682
    %935 = vmatmul.mubr.bf16.gmra.mrb[0].mxu0 %v681
    %v936 = vpop.f32.mrb[0].mxu0
    %v937 = vadd.f32 %v732, %v936
    %v938 = vpop.f32.mrb[0].mxu0
    %v939 = vpop.f32.mrb[0].mxu0
    %v940 = vadd.f32 %v732, %v939
    %v941 = vpop.f32.mrb[0].mxu0
    %942 = vmatprep.mubr.bf16.mxu0 %v684
    %943 = vmatmul.mubr.bf16.gmra.mrb[0].mxu0 %v683
    %v944 = vpop.f32.mrb[0].mxu0
    %v945 = vadd.f32 %v732, %v944
    %v946 = vpop.f32.mrb[0].mxu0
    %v947 = vpop.f32.mrb[0].mxu0
    %v948 = vadd.f32 %v732, %v947
    %v949 = vpop.f32.mrb[0].mxu0
    %950 = vmatprep.mubr.bf16.mxu0 %v686
    %951 = vmatmul.mubr.bf16.gmra.mrb[0].mxu0 %v685
    %v952 = vpop.f32.mrb[0].mxu0
    %v953 = vadd.f32 %v732, %v952
    %v954 = vpop.f32.mrb[0].mxu0
    %v955 = vpop.f32.mrb[0].mxu0
    %v956 = vadd.f32 %v732, %v955
    %v957 = vpop.f32.mrb[0].mxu0
    %958 = vmatprep.mubr.bf16.mxu0 %v688
    %959 = vmatmul.mubr.bf16.gmra.mrb[0].mxu0 %v687
    %v960 = vpop.f32.mrb[0].mxu0
    %v961 = vadd.f32 %v732, %v960
    %v962 = vpop.f32.mrb[0].mxu0
    %v963 = vpop.f32.mrb[0].mxu0
    %v964 = vadd.f32 %v732, %v963
    %v965 = vpop.f32.mrb[0].mxu0
    %966 = vmatprep.mubr.bf16.mxu0 %v690
    %967 = vmatmul.mubr.bf16.gmra.mrb[0].mxu0 %v689
    %v968 = vpop.f32.mrb[0].mxu0
    %v969 = vadd.f32 %v732, %v968
    %v970 = vpop.f32.mrb[0].mxu0
    %v971 = vpop.f32.mrb[0].mxu0
    %v972 = vadd.f32 %v732, %v971
    %v973 = vpop.f32.mrb[0].mxu0
    %974 = vmatprep.mubr.bf16.mxu0 %v692
    %975 = vmatmul.mubr.bf16.gmra.mrb[0].mxu0 %v691
    %v976 = vpop.f32.mrb[0].mxu0
    %v977 = vadd.f32 %v732, %v976
    %v978 = vpop.f32.mrb[0].mxu0
    %v979 = vpop.f32.mrb[0].mxu0
    %v980 = vadd.f32 %v732, %v979
    %v981 = vpop.f32.mrb[0].mxu0
    %982 = vmatprep.mubr.bf16.mxu0 %v694
    %983 = vmatmul.mubr.bf16.gmra.mrb[0].mxu0 %v693
    %v984 = vpop.f32.mrb[0].mxu0
    %v985 = vadd.f32 %v732, %v984
    %v986 = vpop.f32.mrb[0].mxu0
    %v987 = vpop.f32.mrb[0].mxu0
    %v988 = vadd.f32 %v732, %v987
    %v989 = vpop.f32.mrb[0].mxu0
    %990 = vdwg.mxu0
    %991 = vst [vmem:[#allocation8] sm:$0xff] %v865
    %992 = vst [vmem:[#allocation8 + $0x8] sm:$0xff] %v868
    %993 = vst [vmem:[#allocation8 + $0x10] sm:$0xff] %v873
    %994 = vst [vmem:[#allocation8 + $0x18] sm:$0xff] %v876
    %995 = vst [vmem:[#allocation8 + $0x20] sm:$0xff] %v881
    %996 = vst [vmem:[#allocation8 + $0x28] sm:$0xff] %v884
    %997 = vst [vmem:[#allocation8 + $0x30] sm:$0xff] %v889
    %998 = vst [vmem:[#allocation8 + $0x38] sm:$0xff] %v892
    %999 = vst [vmem:[#allocation8 + $0x40] sm:$0xff] %v897
    %1000 = vst [vmem:[#allocation8 + $0x48] sm:$0xff] %v900
    %1001 = vst [vmem:[#allocation8 + $0x50] sm:$0xff] %v905
    %1002 = vst [vmem:[#allocation8 + $0x58] sm:$0xff] %v908
    %1003 = vst [vmem:[#allocation8 + $0x60] sm:$0xff] %v913
    %1004 = vst [vmem:[#allocation8 + $0x68] sm:$0xff] %v916
    %1005 = vst [vmem:[#allocation8 + $0x70] sm:$0xff] %v921
    %1006 = vst [vmem:[#allocation8 + $0x78] sm:$0xff] %v924
    %1007 = vst [vmem:[#allocation8 + $0x80] sm:$0xff] %v929
    %1008 = vst [vmem:[#allocation8 + $0x88] sm:$0xff] %v932
    %1009 = vst [vmem:[#allocation8 + $0x90] sm:$0xff] %v937
    %1010 = vst [vmem:[#allocation8 + $0x98] sm:$0xff] %v940
    %1011 = vst [vmem:[#allocation8 + $0xa0] sm:$0xff] %v945
    %1012 = vst [vmem:[#allocation8 + $0xa8] sm:$0xff] %v948
    %1013 = vst [vmem:[#allocation8 + $0xb0] sm:$0xff] %v953
    %1014 = vst [vmem:[#allocation8 + $0xb8] sm:$0xff] %v956
    %1015 = vst [vmem:[#allocation8 + $0xc0] sm:$0xff] %v961
    %1016 = vst [vmem:[#allocation8 + $0xc8] sm:$0xff] %v964
    %1017 = vst [vmem:[#allocation8 + $0xd0] sm:$0xff] %v969
    %1018 = vst [vmem:[#allocation8 + $0xd8] sm:$0xff] %v972
    %1019 = vst [vmem:[#allocation8 + $0xe0] sm:$0xff] %v977
    %1020 = vst [vmem:[#allocation8 + $0xe8] sm:$0xff] %v980
    %1021 = vst [vmem:[#allocation8 + $0xf0] sm:$0xff] %v985
    %1022 = vst [vmem:[#allocation8 + $0xf8] sm:$0xff] %v988
    // Predicated region
    $region26: #{tpu_custom_call.1} parent=1 // pred_check
      _
    $region27: #{tpu_custom_call.1} parent=1 // pred_check_branch
      %1024 = sbr.rel (0) target = $region29
    $region28: #{tpu_custom_call.1} parent=1 // pred_region
      %s1026 = ssub.s32 4096, 4096
      %1027 = vsyncadd [#allocation7], %s1026
      %s1028 = sshll.u32 [#allocation8], 4
      %s1029 = int_to_ptr.vmem [resolvable:$true] %s1028
      %1034 = dma.vmem_to_hbm [thread:$0]  %s1029, 4096, %s6, [#allocation7], 128, 128, 8
    $region29: #{tpu_custom_call.1} parent=1 // pred_fallthru
      _
    // Predicated region
    $region30: #{tpu_custom_call.1} parent=1 // pred_check
      _
    $region31: #{tpu_custom_call.1} parent=1 // pred_check_branch
      %1036 = sbr.rel (0) target = $region33
    $region32: #{tpu_custom_call.1} parent=1 // pred_region
      %1037 = dma.done [#allocation7], 4096
    $region33: #{tpu_custom_call.1} parent=1 // pred_fallthru
      _
    %1038 = vsyncpa [#allocation6], 1
    %1039 = vsyncpa [#allocation7], 1

</llo_original>
